<compile_context>
chip_gen: v7x
topology: tpu7x:2x2x1
jax: 0.10.0
libtpu: 0.0.40
codegen_flags: <defaults>
</compile_context>

<pallas_src>
import jax
import jax.numpy as jnp
from jax.experimental import pallas as pl
from jax.experimental.pallas import tpu as pltpu

SUBLANE = 8
TILE_BYTES = 4 * 1024 * 1024        # ~4 MiB tiles in the streamed (large) path
FUSED_MAX_BYTES = 4 * 1024 * 1024   # total input bytes handled by the fused tiny path


def _fused_relu_kernel(x_ref, y_ref, z_ref, w_ref, ox_ref, oy_ref, oz_ref, ow_ref):
    # relu(a*2 - 1) applied independently to each of the four resident refs.
    for src, dst in ((x_ref, ox_ref), (y_ref, oy_ref), (z_ref, oz_ref), (w_ref, ow_ref)):
        dst[...] = jnp.maximum(src[...] * 2.0 - 1.0, 0.0)


def _relu_affine_kernel(x_ref, o_ref):
    # Single-tile body for the streamed path; 3 VPU ops, hidden under DMA.
    o_ref[...] = jnp.maximum(x_ref[...] * 2.0 - 1.0, 0.0)


def _as_2d(a):
    """Free (contiguous) reshape to a lane-dense 2-D view; no padding, no copy."""
    n = a.size
    for cols in (1024, 512, 256, 128):
        if n % cols == 0:
            return a.reshape(n // cols, cols)
    return a.reshape(1, n)   # tiny / irregular sizes: single-row view


def _relu_streamed(v):
    """Large-input path: 1-D grid of ~4 MiB row tiles over a (rows, cols) view."""
    rows, cols = v.shape
    itemsize = v.dtype.itemsize
    rows_per_tile = max(SUBLANE, (TILE_BYTES // (cols * itemsize)) // SUBLANE * SUBLANE)
    tile_rows = rows if rows_per_tile >= rows else rows_per_tile
    grid = pl.cdiv(rows, tile_rows)      # ragged last block handled by Pallas clipping
    return pl.pallas_call(
        _relu_affine_kernel,
        out_shape=jax.ShapeDtypeStruct((rows, cols), v.dtype),
        grid=(grid,),
        in_specs=[pl.BlockSpec((tile_rows, cols), lambda i: (i, 0))],
        out_specs=pl.BlockSpec((tile_rows, cols), lambda i: (i, 0)),
        compiler_params=pltpu.CompilerParams(
            dimension_semantics=("parallel",),   # lets v7x's 2 TCs split the rows
            vmem_limit_bytes=32 * 1024 * 1024,   # 2x(in+out) 4 MiB tiles + headroom;
        ),                                       # also lifts v5e's 16 MiB default
    )(v)


def model_forward(x, y, z, w):
    ins = (x, y, z, w)
    views = [_as_2d(a) for a in ins]
    total_bytes = sum(v.size * v.dtype.itemsize for v in views)

    if total_bytes <= FUSED_MAX_BYTES:
        # Tiny case: one pallas_call, four whole-array input refs + four output refs.
        outs2 = pl.pallas_call(
            _fused_relu_kernel,
            out_shape=tuple(jax.ShapeDtypeStruct(v.shape, v.dtype) for v in views),
            in_specs=[pl.BlockSpec(memory_space=pltpu.VMEM)] * 4,
            out_specs=tuple(pl.BlockSpec(memory_space=pltpu.VMEM) for _ in views),
        )(*views)
    else:
        # Scaled-up case: stream each (large) input through big lane-dense tiles.
        outs2 = tuple(_relu_streamed(v) for v in views)

    # Free reshapes back to the original shapes (no HBM pass).
    return tuple(o.reshape(a.shape) for o, a in zip(outs2, ins))


if __name__ == "__main__":
    key = jax.random.PRNGKey(0)
    kx, ky, kz, kw = jax.random.split(key, 4)

    # shapes follow the test's rank progression (2D, 3D, 4D, 5D) at small sizes
    x = jax.random.uniform(kx, (2, 32), dtype=jnp.float32)
    y = jax.random.uniform(ky, (2, 8, 32), dtype=jnp.float32)
    z = jax.random.uniform(kz, (2, 4, 8, 32), dtype=jnp.float32)
    w = jax.random.uniform(kw, (2, 4, 8, 16, 32), dtype=jnp.float32)

    ox, oy, oz, ow = model_forward(x, y, z, w)
    jax.block_until_ready((ox, oy, oz, ow))

    # correctness check against plain-JAX reference
    for got, inp in ((ox, x), (oy, y), (oz, z), (ow, w)):
        ref = jnp.maximum(inp * 2.0 - 1.0, 0.0)
        assert got.shape == inp.shape and got.dtype == inp.dtype
        assert jnp.allclose(got, ref, atol=1e-6), "mismatch vs reference"

    print("KERNEL_OK")
</pallas_src>

<mosaic_0001>
module attributes {stable_mosaic.version = 11 : i64} {
  func.func @_fused_relu_kernel(%arg0: memref<1x64xf32, #tpu.memory_space<vmem>>, %arg1: memref<1x512xf32, #tpu.memory_space<vmem>>, %arg2: memref<2x1024xf32, #tpu.memory_space<vmem>>, %arg3: memref<32x1024xf32, #tpu.memory_space<vmem>>, %arg4: memref<1x64xf32, #tpu.memory_space<vmem>>, %arg5: memref<1x512xf32, #tpu.memory_space<vmem>>, %arg6: memref<2x1024xf32, #tpu.memory_space<vmem>>, %arg7: memref<32x1024xf32, #tpu.memory_space<vmem>>) attributes {dimension_semantics = [], scalar_prefetch = 0 : i64, scratch_operands = 0 : i64, tpu.core_type = #tpu.core_type<tc>} {
    %c0 = arith.constant 0 : index
    %c0_0 = arith.constant 0 : index
    %0 = vector.load %arg0[%c0, %c0_0] : memref<1x64xf32, #tpu.memory_space<vmem>>, vector<1x64xf32>
    %cst = arith.constant 2.000000e+00 : f32
    %1 = vector.broadcast %cst : f32 to vector<1x64xf32>
    %2 = arith.mulf %0, %1 : vector<1x64xf32>
    %cst_1 = arith.constant 1.000000e+00 : f32
    %3 = vector.broadcast %cst_1 : f32 to vector<1x64xf32>
    %4 = arith.subf %2, %3 : vector<1x64xf32>
    %cst_2 = arith.constant 0.000000e+00 : f32
    %5 = vector.broadcast %cst_2 : f32 to vector<1x64xf32>
    %6 = arith.maximumf %4, %5 : vector<1x64xf32>
    %c0_3 = arith.constant 0 : index
    %c0_4 = arith.constant 0 : index
    %7 = vector.load %arg4[%c0_3, %c0_4] : memref<1x64xf32, #tpu.memory_space<vmem>>, vector<1x64xf32>
    tpu.vector_store %arg4[%c0_3, %c0_4], %6 {strides = array<i32>} : memref<1x64xf32, #tpu.memory_space<vmem>>, vector<1x64xf32>,
    %c0_5 = arith.constant 0 : index
    %c0_6 = arith.constant 0 : index
    %8 = vector.load %arg1[%c0_5, %c0_6] : memref<1x512xf32, #tpu.memory_space<vmem>>, vector<1x512xf32>
    %cst_7 = arith.constant 2.000000e+00 : f32
    %9 = vector.broadcast %cst_7 : f32 to vector<1x512xf32>
    %10 = arith.mulf %8, %9 : vector<1x512xf32>
    %cst_8 = arith.constant 1.000000e+00 : f32
    %11 = vector.broadcast %cst_8 : f32 to vector<1x512xf32>
    %12 = arith.subf %10, %11 : vector<1x512xf32>
    %cst_9 = arith.constant 0.000000e+00 : f32
    %13 = vector.broadcast %cst_9 : f32 to vector<1x512xf32>
    %14 = arith.maximumf %12, %13 : vector<1x512xf32>
    %c0_10 = arith.constant 0 : index
    %c0_11 = arith.constant 0 : index
    %15 = vector.load %arg5[%c0_10, %c0_11] : memref<1x512xf32, #tpu.memory_space<vmem>>, vector<1x512xf32>
    tpu.vector_store %arg5[%c0_10, %c0_11], %14 {strides = array<i32>} : memref<1x512xf32, #tpu.memory_space<vmem>>, vector<1x512xf32>,
    %c0_12 = arith.constant 0 : index
    %c0_13 = arith.constant 0 : index
    %16 = vector.load %arg2[%c0_12, %c0_13] : memref<2x1024xf32, #tpu.memory_space<vmem>>, vector<2x1024xf32>
    %cst_14 = arith.constant 2.000000e+00 : f32
    %17 = vector.broadcast %cst_14 : f32 to vector<2x1024xf32>
    %18 = arith.mulf %16, %17 : vector<2x1024xf32>
    %cst_15 = arith.constant 1.000000e+00 : f32
    %19 = vector.broadcast %cst_15 : f32 to vector<2x1024xf32>
    %20 = arith.subf %18, %19 : vector<2x1024xf32>
    %cst_16 = arith.constant 0.000000e+00 : f32
    %21 = vector.broadcast %cst_16 : f32 to vector<2x1024xf32>
    %22 = arith.maximumf %20, %21 : vector<2x1024xf32>
    %c0_17 = arith.constant 0 : index
    %c0_18 = arith.constant 0 : index
    %23 = vector.load %arg6[%c0_17, %c0_18] : memref<2x1024xf32, #tpu.memory_space<vmem>>, vector<2x1024xf32>
    tpu.vector_store %arg6[%c0_17, %c0_18], %22 {strides = array<i32>} : memref<2x1024xf32, #tpu.memory_space<vmem>>, vector<2x1024xf32>,
    %c0_19 = arith.constant 0 : index
    %c0_20 = arith.constant 0 : index
    %24 = vector.load %arg3[%c0_19, %c0_20] : memref<32x1024xf32, #tpu.memory_space<vmem>>, vector<32x1024xf32>
    %cst_21 = arith.constant 2.000000e+00 : f32
    %25 = vector.broadcast %cst_21 : f32 to vector<32x1024xf32>
    %26 = arith.mulf %24, %25 : vector<32x1024xf32>
    %cst_22 = arith.constant 1.000000e+00 : f32
    %27 = vector.broadcast %cst_22 : f32 to vector<32x1024xf32>
    %28 = arith.subf %26, %27 : vector<32x1024xf32>
    %cst_23 = arith.constant 0.000000e+00 : f32
    %29 = vector.broadcast %cst_23 : f32 to vector<32x1024xf32>
    %30 = arith.maximumf %28, %29 : vector<32x1024xf32>
    %c0_24 = arith.constant 0 : index
    %c0_25 = arith.constant 0 : index
    %31 = vector.load %arg7[%c0_24, %c0_25] : memref<32x1024xf32, #tpu.memory_space<vmem>>, vector<32x1024xf32>
    tpu.vector_store %arg7[%c0_24, %c0_25], %30 {strides = array<i32>} : memref<32x1024xf32, #tpu.memory_space<vmem>>, vector<32x1024xf32>,
    return
  }
}

</mosaic_0001>

<llo_original>
// kernel: tpu_custom_call.1
$region0: #{tpu_custom_call.1}
  #allocation0 [shape = 'u32[]', space=smem, size = 0x4, offset = 0x4, fixed_abs, tag = 'smem constant byte address 0x4 - core index']
  #allocation1 [shape = 'u32[144,128]{1,0:T(1,128)}', space=vmem, size = 0x12000, scoped, tag = 'internal scratch']
  %s0 = inlined_call_operand.hbm [shape: f32[1,64], index: 0, kind: input, shape index: {}]
  %s1 = inlined_call_operand.hbm [shape: f32[1,512], index: 1, kind: input, shape index: {}]
  %s2 = inlined_call_operand.hbm [shape: f32[2,1024], index: 2, kind: input, shape index: {}]
  %s3 = inlined_call_operand.hbm [shape: f32[32,1024], index: 3, kind: input, shape index: {}]
  %s4 = inlined_call_operand.hbm [shape: f32[1,64], index: 4, kind: output, shape index: {0}]
  %s5 = inlined_call_operand.hbm [shape: f32[1,512], index: 5, kind: output, shape index: {1}]
  %s6 = inlined_call_operand.hbm [shape: f32[2,1024], index: 6, kind: output, shape index: {2}]
  %s7 = inlined_call_operand.hbm [shape: f32[32,1024], index: 7, kind: output, shape index: {3}]
  %8 = xla_tuple %s4, %s5, %s6, %s7
  %s9 = sld [smem:[#allocation0]]
  $region66: #{tpu_custom_call.1} parent=0
    _
  %s11 = ssub.s32 1, %s9
  %s12 = scalar_select 0, %s11, %s9
  $region1: #{tpu_custom_call.1} parent=0
    #allocation2 [shape = 'u8[512]{0}', space=vmem, size = 0x400, scoped, tag = 'input window, operand 0, single buffered']
    #allocation3 [shape = 's32[1]{0}', space=sflag, size = 0x4, scoped, tag = 'scoped memory for tpu_custom_call.1']
    #allocation4 [shape = 's32[1]{0}', space=sflag, size = 0x4, scoped, tag = 'scoped memory for tpu_custom_call.1']
    #allocation5 [shape = 'u8[2048]{0}', space=vmem, size = 0x800, scoped, tag = 'input window, operand 1, single buffered']
    #allocation6 [shape = 's32[1]{0}', space=sflag, size = 0x4, scoped, tag = 'scoped memory for tpu_custom_call.1']
    #allocation7 [shape = 'u8[8192]{0}', space=vmem, size = 0x2000, scoped, tag = 'input window, operand 2, single buffered']
    #allocation8 [shape = 'u8[131072]{0}', space=vmem, size = 0x20000, scoped, tag = 'input window, operand 3, single buffered']
    #allocation9 [shape = 's32[1]{0}', space=sflag, size = 0x4, scoped, tag = 'scoped memory for tpu_custom_call.1']
    #allocation10 [shape = 'u8[512]{0}', space=vmem, size = 0x400, scoped, tag = 'output window, operand 0, single buffered']
    #allocation11 [shape = 'u8[2048]{0}', space=vmem, size = 0x800, scoped, tag = 'output window, operand 1, single buffered']
    #allocation12 [shape = 's32[1]{0}', space=sflag, size = 0x4, scoped, tag = 'scoped memory for tpu_custom_call.1']
    #allocation13 [shape = 'u8[8192]{0}', space=vmem, size = 0x2000, scoped, tag = 'output window, operand 2, single buffered']
    #allocation14 [shape = 'u8[131072]{0}', space=vmem, size = 0x20000, scoped, tag = 'output window, operand 3, single buffered']
    #allocation15 [shape = 's32[1]{0}', space=sflag, size = 0x4, scoped, tag = 'scoped memory for tpu_custom_call.1']
    %13 = vsyncpa [#allocation3], 0
    %14 = vsyncpa [#allocation6], 0
    %15 = vsyncpa [#allocation9], 0
    %16 = vsyncpa [#allocation4], 0
    %17 = vsyncpa [#allocation12], 0
    %18 = vsyncpa [#allocation15], 0
    // Predicated region
    $region2: #{tpu_custom_call.1} parent=1 // pred_check
      _
    $region3: #{tpu_custom_call.1} parent=1 // pred_check_branch
      %20 = sbr.rel (0) target = $region5
    $region4: #{tpu_custom_call.1} parent=1 // pred_region
      %s22 = ssub.s32 16, 16
      %23 = vsyncadd [#allocation3], %s22
      %s25 = sshll.u32 [#allocation2], 4
      %s26 = int_to_ptr.vmem [resolvable:$true] %s25
      %28 = dma.hbm_to_vmem [thread:$0]  %s0, 16, %s26, [#allocation3]
    $region5: #{tpu_custom_call.1} parent=1 // pred_fallthru
      _
    // Predicated region
    $region6: #{tpu_custom_call.1} parent=1 // pred_check
      _
    $region7: #{tpu_custom_call.1} parent=1 // pred_check_branch
      %30 = sbr.rel (0) target = $region9
    $region8: #{tpu_custom_call.1} parent=1 // pred_region
      %s32 = ssub.s32 64, 64
      %33 = vsyncadd [#allocation6], %s32
      %s35 = sshll.u32 [#allocation5], 4
      %s36 = int_to_ptr.vmem [resolvable:$true] %s35
      %38 = dma.hbm_to_vmem [thread:$0]  %s1, 64, %s36, [#allocation6]
    $region9: #{tpu_custom_call.1} parent=1 // pred_fallthru
      _
    // Predicated region
    $region10: #{tpu_custom_call.1} parent=1 // pred_check
      _
    $region11: #{tpu_custom_call.1} parent=1 // pred_check_branch
      %40 = sbr.rel (0) target = $region13
    $region12: #{tpu_custom_call.1} parent=1 // pred_region
      %s42 = ssub.s32 256, 256
      %43 = vsyncadd [#allocation6], %s42
      %s45 = sshll.u32 [#allocation7], 4
      %s46 = int_to_ptr.vmem [resolvable:$true] %s45
      %48 = dma.hbm_to_vmem [thread:$0]  %s2, 256, %s46, [#allocation6]
    $region13: #{tpu_custom_call.1} parent=1 // pred_fallthru
      _
    // Predicated region
    $region14: #{tpu_custom_call.1} parent=1 // pred_check
      _
    $region15: #{tpu_custom_call.1} parent=1 // pred_check_branch
      %50 = sbr.rel (0) target = $region17
    $region16: #{tpu_custom_call.1} parent=1 // pred_region
      %s52 = ssub.s32 4096, 4096
      %53 = vsyncadd [#allocation9], %s52
      %s54 = sshll.u32 [#allocation8], 4
      %s55 = int_to_ptr.vmem [resolvable:$true] %s54
      %60 = dma.hbm_to_vmem [thread:$0]  %s3, 4096, %s55, [#allocation9], 1024, 1024, 64
    $region17: #{tpu_custom_call.1} parent=1 // pred_fallthru
      _
    // Predicated region
    $region18: #{tpu_custom_call.1} parent=1 // pred_check
      _
    $region19: #{tpu_custom_call.1} parent=1 // pred_check_branch
      %62 = sbr.rel (0) target = $region21
    $region20: #{tpu_custom_call.1} parent=1 // pred_region
      %63 = dma.done [#allocation3], 16
    $region21: #{tpu_custom_call.1} parent=1 // pred_fallthru
      _
    // Predicated region
    $region22: #{tpu_custom_call.1} parent=1 // pred_check
      _
    $region23: #{tpu_custom_call.1} parent=1 // pred_check_branch
      %65 = sbr.rel (0) target = $region25
    $region24: #{tpu_custom_call.1} parent=1 // pred_region
      %66 = dma.done [#allocation6], 64
    $region25: #{tpu_custom_call.1} parent=1 // pred_fallthru
      _
    // Predicated region
    $region26: #{tpu_custom_call.1} parent=1 // pred_check
      _
    $region27: #{tpu_custom_call.1} parent=1 // pred_check_branch
      %68 = sbr.rel (0) target = $region29
    $region28: #{tpu_custom_call.1} parent=1 // pred_region
      %69 = dma.done [#allocation6], 256
    $region29: #{tpu_custom_call.1} parent=1 // pred_fallthru
      _
    // Predicated region
    $region30: #{tpu_custom_call.1} parent=1 // pred_check
      _
    $region31: #{tpu_custom_call.1} parent=1 // pred_check_branch
      %71 = sbr.rel (0) target = $region33
    $region32: #{tpu_custom_call.1} parent=1 // pred_region
      %72 = dma.done [#allocation9], 4096
    $region33: #{tpu_custom_call.1} parent=1 // pred_fallthru
      _
    %v73 = vld [vmem:[#allocation2] sm:$0x1]
    %v74 = vmul.f32 %v73, 2.0
    %v75 = vsub.f32 %v74, 1.0
    %v76 = vmax.f32 %v75, 0.0
    %vm77 = vcmask 516096
    %78 = vst.msk [vmem:[#allocation10] sm:$0x1] %vm77, %v76
    %v79 = vld [vmem:[#allocation5] sm:$0xf]
    %v80 = vmul.f32 %v79, 2.0
    %v81 = vsub.f32 %v80, 1.0
    %v82 = vmax.f32 %v81, 0.0
    %v83 = vlaneseq
    %vm84 = vcmp.ge.s32.totalorder %v83, 0
    %vm85 = vcmp.lt.s32.totalorder %v83, 512
    %vm86 = vmand %vm84, %vm85
    %87 = vst.msk [vmem:[#allocation11] sm:$0xf] %vm86, %v82
    %v88 = vld [vmem:[#allocation7] sm:$0xff]
    %v89 = vld [vmem:[#allocation7 + $0x8] sm:$0xff]
    %v90 = vmul.f32 %v88, 2.0
    %v91 = vmul.f32 %v89, 2.0
    %v92 = vsub.f32 %v90, 1.0
    %v93 = vsub.f32 %v91, 1.0
    %v94 = vmax.f32 %v92, 0.0
    %v95 = vmax.f32 %v93, 0.0
    %96 = vst [vmem:[#allocation13] sm:$0xff] %v94
    %97 = vst [vmem:[#allocation13 + $0x8] sm:$0xff] %v95
    %v98 = vld [vmem:[#allocation8] sm:$0xff]
    %v99 = vld [vmem:[#allocation8 + $0x8] sm:$0xff]
    %v100 = vld [vmem:[#allocation8 + $0x10] sm:$0xff]
    %v101 = vld [vmem:[#allocation8 + $0x18] sm:$0xff]
    %v102 = vld [vmem:[#allocation8 + $0x20] sm:$0xff]
    %v103 = vld [vmem:[#allocation8 + $0x28] sm:$0xff]
    %v104 = vld [vmem:[#allocation8 + $0x30] sm:$0xff]
    %v105 = vld [vmem:[#allocation8 + $0x38] sm:$0xff]
    %v106 = vld [vmem:[#allocation8 + $0x40] sm:$0xff]
    %v107 = vld [vmem:[#allocation8 + $0x48] sm:$0xff]
    %v108 = vld [vmem:[#allocation8 + $0x50] sm:$0xff]
    %v109 = vld [vmem:[#allocation8 + $0x58] sm:$0xff]
    %v110 = vld [vmem:[#allocation8 + $0x60] sm:$0xff]
    %v111 = vld [vmem:[#allocation8 + $0x68] sm:$0xff]
    %v112 = vld [vmem:[#allocation8 + $0x70] sm:$0xff]
    %v113 = vld [vmem:[#allocation8 + $0x78] sm:$0xff]
    %v114 = vld [vmem:[#allocation8 + $0x80] sm:$0xff]
    %v115 = vld [vmem:[#allocation8 + $0x88] sm:$0xff]
    %v116 = vld [vmem:[#allocation8 + $0x90] sm:$0xff]
    %v117 = vld [vmem:[#allocation8 + $0x98] sm:$0xff]
    %v118 = vld [vmem:[#allocation8 + $0xa0] sm:$0xff]
    %v119 = vld [vmem:[#allocation8 + $0xa8] sm:$0xff]
    %v120 = vld [vmem:[#allocation8 + $0xb0] sm:$0xff]
    %v121 = vld [vmem:[#allocation8 + $0xb8] sm:$0xff]
    %v122 = vld [vmem:[#allocation8 + $0xc0] sm:$0xff]
    %v123 = vld [vmem:[#allocation8 + $0xc8] sm:$0xff]
    %v124 = vld [vmem:[#allocation8 + $0xd0] sm:$0xff]
    %v125 = vld [vmem:[#allocation8 + $0xd8] sm:$0xff]
    %v126 = vld [vmem:[#allocation8 + $0xe0] sm:$0xff]
    %v127 = vld [vmem:[#allocation8 + $0xe8] sm:$0xff]
    %v128 = vld [vmem:[#allocation8 + $0xf0] sm:$0xff]
    %v129 = vld [vmem:[#allocation8 + $0xf8] sm:$0xff]
    %v130 = vmul.f32 %v98, 2.0
    %v131 = vmul.f32 %v99, 2.0
    %v132 = vmul.f32 %v100, 2.0
    %v133 = vmul.f32 %v101, 2.0
    %v134 = vmul.f32 %v102, 2.0
    %v135 = vmul.f32 %v103, 2.0
    %v136 = vmul.f32 %v104, 2.0
    %v137 = vmul.f32 %v105, 2.0
    %v138 = vmul.f32 %v106, 2.0
    %v139 = vmul.f32 %v107, 2.0
    %v140 = vmul.f32 %v108, 2.0
    %v141 = vmul.f32 %v109, 2.0
    %v142 = vmul.f32 %v110, 2.0
    %v143 = vmul.f32 %v111, 2.0
    %v144 = vmul.f32 %v112, 2.0
    %v145 = vmul.f32 %v113, 2.0
    %v146 = vmul.f32 %v114, 2.0
    %v147 = vmul.f32 %v115, 2.0
    %v148 = vmul.f32 %v116, 2.0
    %v149 = vmul.f32 %v117, 2.0
    %v150 = vmul.f32 %v118, 2.0
    %v151 = vmul.f32 %v119, 2.0
    %v152 = vmul.f32 %v120, 2.0
    %v153 = vmul.f32 %v121, 2.0
    %v154 = vmul.f32 %v122, 2.0
    %v155 = vmul.f32 %v123, 2.0
    %v156 = vmul.f32 %v124, 2.0
    %v157 = vmul.f32 %v125, 2.0
    %v158 = vmul.f32 %v126, 2.0
    %v159 = vmul.f32 %v127, 2.0
    %v160 = vmul.f32 %v128, 2.0
    %v161 = vmul.f32 %v129, 2.0
    %v162 = vsub.f32 %v130, 1.0
    %v163 = vsub.f32 %v131, 1.0
    %v164 = vsub.f32 %v132, 1.0
    %v165 = vsub.f32 %v133, 1.0
    %v166 = vsub.f32 %v134, 1.0
    %v167 = vsub.f32 %v135, 1.0
    %v168 = vsub.f32 %v136, 1.0
    %v169 = vsub.f32 %v137, 1.0
    %v170 = vsub.f32 %v138, 1.0
    %v171 = vsub.f32 %v139, 1.0
    %v172 = vsub.f32 %v140, 1.0
    %v173 = vsub.f32 %v141, 1.0
    %v174 = vsub.f32 %v142, 1.0
    %v175 = vsub.f32 %v143, 1.0
    %v176 = vsub.f32 %v144, 1.0
    %v177 = vsub.f32 %v145, 1.0
    %v178 = vsub.f32 %v146, 1.0
    %v179 = vsub.f32 %v147, 1.0
    %v180 = vsub.f32 %v148, 1.0
    %v181 = vsub.f32 %v149, 1.0
    %v182 = vsub.f32 %v150, 1.0
    %v183 = vsub.f32 %v151, 1.0
    %v184 = vsub.f32 %v152, 1.0
    %v185 = vsub.f32 %v153, 1.0
    %v186 = vsub.f32 %v154, 1.0
    %v187 = vsub.f32 %v155, 1.0
    %v188 = vsub.f32 %v156, 1.0
    %v189 = vsub.f32 %v157, 1.0
    %v190 = vsub.f32 %v158, 1.0
    %v191 = vsub.f32 %v159, 1.0
    %v192 = vsub.f32 %v160, 1.0
    %v193 = vsub.f32 %v161, 1.0
    %v194 = vmax.f32 %v162, 0.0
    %v195 = vmax.f32 %v163, 0.0
    %v196 = vmax.f32 %v164, 0.0
    %v197 = vmax.f32 %v165, 0.0
    %v198 = vmax.f32 %v166, 0.0
    %v199 = vmax.f32 %v167, 0.0
    %v200 = vmax.f32 %v168, 0.0
    %v201 = vmax.f32 %v169, 0.0
    %v202 = vmax.f32 %v170, 0.0
    %v203 = vmax.f32 %v171, 0.0
    %v204 = vmax.f32 %v172, 0.0
    %v205 = vmax.f32 %v173, 0.0
    %v206 = vmax.f32 %v174, 0.0
    %v207 = vmax.f32 %v175, 0.0
    %v208 = vmax.f32 %v176, 0.0
    %v209 = vmax.f32 %v177, 0.0
    %v210 = vmax.f32 %v178, 0.0
    %v211 = vmax.f32 %v179, 0.0
    %v212 = vmax.f32 %v180, 0.0
    %v213 = vmax.f32 %v181, 0.0
    %v214 = vmax.f32 %v182, 0.0
    %v215 = vmax.f32 %v183, 0.0
    %v216 = vmax.f32 %v184, 0.0
    %v217 = vmax.f32 %v185, 0.0
    %v218 = vmax.f32 %v186, 0.0
    %v219 = vmax.f32 %v187, 0.0
    %v220 = vmax.f32 %v188, 0.0
    %v221 = vmax.f32 %v189, 0.0
    %v222 = vmax.f32 %v190, 0.0
    %v223 = vmax.f32 %v191, 0.0
    %v224 = vmax.f32 %v192, 0.0
    %v225 = vmax.f32 %v193, 0.0
    %226 = vst [vmem:[#allocation14] sm:$0xff] %v194
    %227 = vst [vmem:[#allocation14 + $0x8] sm:$0xff] %v195
    %228 = vst [vmem:[#allocation14 + $0x10] sm:$0xff] %v196
    %229 = vst [vmem:[#allocation14 + $0x18] sm:$0xff] %v197
    %230 = vst [vmem:[#allocation14 + $0x20] sm:$0xff] %v198
    %231 = vst [vmem:[#allocation14 + $0x28] sm:$0xff] %v199
    %232 = vst [vmem:[#allocation14 + $0x30] sm:$0xff] %v200
    %233 = vst [vmem:[#allocation14 + $0x38] sm:$0xff] %v201
    %234 = vst [vmem:[#allocation14 + $0x40] sm:$0xff] %v202
    %235 = vst [vmem:[#allocation14 + $0x48] sm:$0xff] %v203
    %236 = vst [vmem:[#allocation14 + $0x50] sm:$0xff] %v204
    %237 = vst [vmem:[#allocation14 + $0x58] sm:$0xff] %v205
    %238 = vst [vmem:[#allocation14 + $0x60] sm:$0xff] %v206
    %239 = vst [vmem:[#allocation14 + $0x68] sm:$0xff] %v207
    %240 = vst [vmem:[#allocation14 + $0x70] sm:$0xff] %v208
    %241 = vst [vmem:[#allocation14 + $0x78] sm:$0xff] %v209
    %242 = vst [vmem:[#allocation14 + $0x80] sm:$0xff] %v210
    %243 = vst [vmem:[#allocation14 + $0x88] sm:$0xff] %v211
    %244 = vst [vmem:[#allocation14 + $0x90] sm:$0xff] %v212
    %245 = vst [vmem:[#allocation14 + $0x98] sm:$0xff] %v213
    %246 = vst [vmem:[#allocation14 + $0xa0] sm:$0xff] %v214
    %247 = vst [vmem:[#allocation14 + $0xa8] sm:$0xff] %v215
    %248 = vst [vmem:[#allocation14 + $0xb0] sm:$0xff] %v216
    %249 = vst [vmem:[#allocation14 + $0xb8] sm:$0xff] %v217
    %250 = vst [vmem:[#allocation14 + $0xc0] sm:$0xff] %v218
    %251 = vst [vmem:[#allocation14 + $0xc8] sm:$0xff] %v219
    %252 = vst [vmem:[#allocation14 + $0xd0] sm:$0xff] %v220
    %253 = vst [vmem:[#allocation14 + $0xd8] sm:$0xff] %v221
    %254 = vst [vmem:[#allocation14 + $0xe0] sm:$0xff] %v222
    %255 = vst [vmem:[#allocation14 + $0xe8] sm:$0xff] %v223
    %256 = vst [vmem:[#allocation14 + $0xf0] sm:$0xff] %v224
    %257 = vst [vmem:[#allocation14 + $0xf8] sm:$0xff] %v225
    // Predicated region
    $region34: #{tpu_custom_call.1} parent=1 // pred_check
      _
    $region35: #{tpu_custom_call.1} parent=1 // pred_check_branch
      %259 = sbr.rel (0) target = $region37
    $region36: #{tpu_custom_call.1} parent=1 // pred_region
      %s261 = ssub.s32 16, 16
      %262 = vsyncadd [#allocation4], %s261
      %s264 = sshll.u32 [#allocation10], 4
      %s265 = int_to_ptr.vmem [resolvable:$true] %s264
      %267 = dma.vmem_to_hbm [thread:$0]  %s265, 16, %s4, [#allocation4]
    $region37: #{tpu_custom_call.1} parent=1 // pred_fallthru
      _
    // Predicated region
    $region38: #{tpu_custom_call.1} parent=1 // pred_check
      _
    $region39: #{tpu_custom_call.1} parent=1 // pred_check_branch
      %269 = sbr.rel (0) target = $region41
    $region40: #{tpu_custom_call.1} parent=1 // pred_region
      %s271 = ssub.s32 64, 64
      %272 = vsyncadd [#allocation12], %s271
      %s274 = sshll.u32 [#allocation11], 4
      %s275 = int_to_ptr.vmem [resolvable:$true] %s274
      %277 = dma.vmem_to_hbm [thread:$0]  %s275, 64, %s5, [#allocation12]
    $region41: #{tpu_custom_call.1} parent=1 // pred_fallthru
      _
    // Predicated region
    $region42: #{tpu_custom_call.1} parent=1 // pred_check
      _
    $region43: #{tpu_custom_call.1} parent=1 // pred_check_branch
      %279 = sbr.rel (0) target = $region45
    $region44: #{tpu_custom_call.1} parent=1 // pred_region
      %s281 = ssub.s32 256, 256
      %282 = vsyncadd [#allocation12], %s281
      %s284 = sshll.u32 [#allocation13], 4
      %s285 = int_to_ptr.vmem [resolvable:$true] %s284
      %287 = dma.vmem_to_hbm [thread:$0]  %s285, 256, %s6, [#allocation12]
    $region45: #{tpu_custom_call.1} parent=1 // pred_fallthru
      _
    // Predicated region
    $region46: #{tpu_custom_call.1} parent=1 // pred_check
      _
    $region47: #{tpu_custom_call.1} parent=1 // pred_check_branch
      %289 = sbr.rel (0) target = $region49
    $region48: #{tpu_custom_call.1} parent=1 // pred_region
      %s291 = ssub.s32 4096, 4096
      %292 = vsyncadd [#allocation15], %s291
      %s293 = sshll.u32 [#allocation14], 4
      %s294 = int_to_ptr.vmem [resolvable:$true] %s293
      %299 = dma.vmem_to_hbm [thread:$0]  %s294, 4096, %s7, [#allocation15], 1024, 1024, 64
    $region49: #{tpu_custom_call.1} parent=1 // pred_fallthru
      _
    // Predicated region
    $region50: #{tpu_custom_call.1} parent=1 // pred_check
      _
    $region51: #{tpu_custom_call.1} parent=1 // pred_check_branch
      %301 = sbr.rel (0) target = $region53
    $region52: #{tpu_custom_call.1} parent=1 // pred_region
      %302 = dma.done [#allocation4], 16
    $region53: #{tpu_custom_call.1} parent=1 // pred_fallthru
      _
    // Predicated region
    $region54: #{tpu_custom_call.1} parent=1 // pred_check
      _
    $region55: #{tpu_custom_call.1} parent=1 // pred_check_branch
      %304 = sbr.rel (0) target = $region57
    $region56: #{tpu_custom_call.1} parent=1 // pred_region
      %305 = dma.done [#allocation12], 64
    $region57: #{tpu_custom_call.1} parent=1 // pred_fallthru
      _
    // Predicated region
    $region58: #{tpu_custom_call.1} parent=1 // pred_check
      _
    $region59: #{tpu_custom_call.1} parent=1 // pred_check_branch
      %307 = sbr.rel (0) target = $region61
    $region60: #{tpu_custom_call.1} parent=1 // pred_region
      %308 = dma.done [#allocation12], 256
    $region61: #{tpu_custom_call.1} parent=1 // pred_fallthru
      _
    // Predicated region
    $region62: #{tpu_custom_call.1} parent=1 // pred_check
      _
    $region63: #{tpu_custom_call.1} parent=1 // pred_check_branch
      %310 = sbr.rel (0) target = $region65
    $region64: #{tpu_custom_call.1} parent=1 // pred_region
      %311 = dma.done [#allocation15], 4096
    $region65: #{tpu_custom_call.1} parent=1 // pred_fallthru
      _
    %312 = vsyncpa [#allocation3], 1
    %313 = vsyncpa [#allocation6], 1
    %314 = vsyncpa [#allocation9], 1
    %315 = vsyncpa [#allocation4], 1
    %316 = vsyncpa [#allocation12], 1
    %317 = vsyncpa [#allocation15], 1

</llo_original>
